<compile_context>
chip_gen: v7x
topology: tpu7x:2x2x1
jax: 0.10.0
libtpu: 0.0.40
codegen_flags: <defaults>
</compile_context>

<pallas_src>
import functools
import math

import numpy as np
import jax
import jax.numpy as jnp
from jax.experimental import pallas as pl
from jax.experimental.pallas import tpu as pltpu


def _causal_kernel(x_ref,
                   w1_ref, b1_ref,
                   w2q_ref, b2q_ref, w2k_ref, b2k_ref,
                   w3_ref, b3_ref, w4_ref, b4_ref,
                   out_ref, *, S, N, D, BB, s_chunk):
    # x_ref: (BB, S, N) -- one block of BB batch elements (lane-dense natural layout).
    xk = x_ref[...]                                                     # (BB, S, N)

    # ---- input_layer: Linear(1, D) -> ReLU  (outer-product broadcast on the VPU) ----
    h4 = jnp.maximum(xk[..., None] * w1_ref[...] + b1_ref[...], 0.0)    # (BB, S, N, D)
    hf = h4.reshape(BB * S * N, D)                                      # rows = (b, s, n) sites

    # ---- Linear(D, 2D) split into two (D, D) MXU matmuls (no lane slice) ----
    q = jnp.dot(hf, w2q_ref[...], preferred_element_type=jnp.float32) + b2q_ref[...]
    k = jnp.dot(hf, w2k_ref[...], preferred_element_type=jnp.float32) + b2k_ref[...]
    q4 = q.reshape(BB, S, N, D)                                         # (BB, S, N, D)
    k4 = k.reshape(BB, S, N, D)

    # ---- einsum('b s i d, b s j d -> b i j d') * S**-0.5, chunked over S ----
    # The broadcast product per chunk is (BB, Sc, N, N, D); chunking keeps it bounded
    # in VMEM for large S (important on v7x with 64 MiB VMEM).
    def _chunk(lo, hi):
        qc = q4[:, lo:hi]                                               # (BB, Sc, N, D)
        kc = k4[:, lo:hi]
        return jnp.sum(qc[:, :, :, None, :] * kc[:, :, None, :, :], axis=1)

    n_chunks = -(-S // s_chunk)
    att = _chunk(0, min(S, s_chunk))
    for c in range(1, n_chunks):
        att = att + _chunk(c * s_chunk, min(S, (c + 1) * s_chunk))
    att = att * (float(S) ** -0.5)                                      # (BB, N, N, D)

    # ---- final: Linear(D, D) -> ReLU -> Linear(D, 1) ----
    af = att.reshape(BB * N * N, D)
    f = jnp.maximum(jnp.dot(af, w3_ref[...], preferred_element_type=jnp.float32)
                    + b3_ref[...], 0.0)                                 # (BB*N*N, D)
    # Linear(D, 1) as VPU multiply + lane reduce (XLU) instead of a 1-column MXU matvec.
    y_col = jnp.sum(f * w4_ref[...], axis=-1, keepdims=True) + b4_ref[...]   # (BB*N*N, 1)
    out_ref[0] = y_col.T                                                # (1, BB*N*N), lane-dense store


def _vmem_limit_bytes(BB, S, N, D, s_chunk):
    f32 = 4
    acts = (3 * BB * S * N * D                 # h, q, k
            + BB * s_chunk * N * N * D         # one einsum chunk product
            + 2 * BB * N * N * D)              # att, f
    io = 2 * (BB * S * N) + 2 * (BB * N * N)   # double-buffered x / out blocks
    par = 3 * D * D + 8 * D + 1
    est = (acts + io + par) * f32
    return int(min(64 * 1024 * 1024, max(32 * 1024 * 1024, 4 * est)))


def causal_model_forward(x, params, *, batch_block=None, s_chunk=256):
    B, S, N = x.shape
    w1, b1, w2, b2, w3, b3, w4, b4 = params
    D = w1.shape[1]

    # Fold batches into the matmul row dim, but keep >=2 parallel grid steps when B>=2
    # so v7x's two TensorCores both get work.
    if batch_block is None:
        if B <= 2:
            batch_block = 1
        else:
            batch_block = max(d for d in range(1, B // 2 + 1) if B % d == 0)
    assert B % batch_block == 0, "batch_block must divide the batch size"
    BB = batch_block
    G = B // BB
    sc = max(1, min(s_chunk, S))

    # Static wrapper-side param prep (free): split w2/b2 into q/k halves, w4 as a lane row.
    w2q, w2k = w2[:, :D], w2[:, D:]
    b2q, b2k = b2[:, :D], b2[:, D:]
    w4r = w4.reshape(1, D)
    kparams = (w1, b1, w2q, b2q, w2k, b2k, w3, b3, w4r, b4)

    # Full-array blocks with grid-invariant index maps -> weights stay resident in VMEM.
    def resident_spec(a):
        nd = a.ndim
        return pl.BlockSpec(a.shape, lambda g, _nd=nd: (0,) * _nd)

    kernel = functools.partial(_causal_kernel, S=S, N=N, D=D, BB=BB, s_chunk=sc)

    out = pl.pallas_call(
        kernel,
        out_shape=jax.ShapeDtypeStruct((G, 1, BB * N * N), jnp.float32),
        grid_spec=pltpu.PrefetchScalarGridSpec(
            num_scalar_prefetch=0,
            grid=(G,),
            in_specs=[pl.BlockSpec((BB, S, N), lambda g: (g, 0, 0))]
                     + [resident_spec(p) for p in kparams],
            out_specs=pl.BlockSpec((1, 1, BB * N * N), lambda g: (g, 0, 0)),
        ),
        compiler_params=pltpu.CompilerParams(
            dimension_semantics=("parallel",),
            vmem_limit_bytes=_vmem_limit_bytes(BB, S, N, D, sc),
        ),
    )(x, *kparams)
    return out.reshape(B, N, N)


def reference_forward(x, params):
    """Pure-JAX reference, mirrors the PyTorch forward exactly."""
    w1, b1, w2, b2, w3, b3, w4, b4 = params
    D = w1.shape[1]
    hp = jax.lax.Precision.HIGHEST
    xe = x[..., None]                                                   # (B,S,N,1)
    h = jax.nn.relu(jnp.matmul(xe, w1, precision=hp) + b1)              # (B,S,N,D)
    qk = jnp.matmul(h, w2, precision=hp) + b2                           # (B,S,N,2D)
    q, k = qk[..., :D], qk[..., D:]
    att = jnp.einsum('bsid,bsjd->bijd', q, k, precision=hp) * x.shape[1] ** (-0.5)
    f = jax.nn.relu(jnp.matmul(att, w3, precision=hp) + b3)
    y = (jnp.matmul(f, w4, precision=hp) + b4)[..., 0]                  # (B,N,N)
    return y


if __name__ == "__main__":
    S, N, D = 8, 4, 32     # samples, variables, d_model

    def make_params(key, D):
        ks = jax.random.split(key, 8)

        def init(k, shape, fan_in, s=1.0):
            return s * jax.random.normal(k, shape, dtype=jnp.float32) / math.sqrt(fan_in)

        # Linear weights stored as (in, out).
        return (
            init(ks[0], (1, D), 1),            # input_layer[0].weight
            init(ks[1], (1, D), 1, 0.1),       # input_layer[0].bias
            init(ks[2], (D, 2 * D), D),        # input_layer[2].weight
            init(ks[3], (1, 2 * D), D, 0.1),   # input_layer[2].bias
            init(ks[4], (D, D), D),            # final[0].weight
            init(ks[5], (1, D), D, 0.1),       # final[0].bias
            init(ks[6], (D, 1), D),            # final[2].weight
            init(ks[7], (1, 1), D, 0.1),       # final[2].bias
        )

    key = jax.random.PRNGKey(0)
    kp, kx1, kx2 = jax.random.split(key, 3)
    params = make_params(kp, D)

    # Config (a): B=2 -> grid of 2 parallel steps (one per TensorCore on v7x).
    x1 = jax.random.normal(kx1, (2, S, N), dtype=jnp.float32)
    y1 = jax.block_until_ready(causal_model_forward(x1, params))
    np.testing.assert_allclose(np.asarray(y1), np.asarray(reference_forward(x1, params)),
                               rtol=1e-2, atol=1e-2)

    # Config (b): B=4 -> 2 batch elements folded per grid step (exercises the fold path).
    x2 = jax.random.normal(kx2, (4, S, N), dtype=jnp.float32)
    y2 = jax.block_until_ready(causal_model_forward(x2, params))
    np.testing.assert_allclose(np.asarray(y2), np.asarray(reference_forward(x2, params)),
                               rtol=1e-2, atol=1e-2)

    print("KERNEL_OK")
</pallas_src>

<mosaic_0001>
module attributes {stable_mosaic.version = 11 : i64} {
  func.func @_causal_kernel(%arg0: i32, %arg1: memref<1x8x4xf32, #tpu.memory_space<vmem>>, %arg2: memref<1x32xf32, #tpu.memory_space<vmem>>, %arg3: memref<1x32xf32, #tpu.memory_space<vmem>>, %arg4: memref<32x32xf32, #tpu.memory_space<vmem>>, %arg5: memref<1x32xf32, #tpu.memory_space<vmem>>, %arg6: memref<32x32xf32, #tpu.memory_space<vmem>>, %arg7: memref<1x32xf32, #tpu.memory_space<vmem>>, %arg8: memref<32x32xf32, #tpu.memory_space<vmem>>, %arg9: memref<1x32xf32, #tpu.memory_space<vmem>>, %arg10: memref<1x32xf32, #tpu.memory_space<vmem>>, %arg11: memref<1x1xf32, #tpu.memory_space<vmem>>, %arg12: memref<1x1x16xf32, #tpu.memory_space<vmem>>) attributes {dimension_semantics = [#tpu.dimension_semantics<parallel>], iteration_bounds = array<i64: 2>, scalar_prefetch = 0 : i64, scratch_operands = 0 : i64, tpu.core_type = #tpu.core_type<tc>, window_params = [{transform_indices = @transform_0, window_bounds = array<i64: 1, 8, 4>}, {pipeline_mode = #tpu.pipeline_mode<synchronous>, transform_indices = @transform_1, window_bounds = array<i64: 1, 32>}, {pipeline_mode = #tpu.pipeline_mode<synchronous>, transform_indices = @transform_2, window_bounds = array<i64: 1, 32>}, {pipeline_mode = #tpu.pipeline_mode<synchronous>, transform_indices = @transform_3, window_bounds = array<i64: 32, 32>}, {pipeline_mode = #tpu.pipeline_mode<synchronous>, transform_indices = @transform_4, window_bounds = array<i64: 1, 32>}, {pipeline_mode = #tpu.pipeline_mode<synchronous>, transform_indices = @transform_5, window_bounds = array<i64: 32, 32>}, {pipeline_mode = #tpu.pipeline_mode<synchronous>, transform_indices = @transform_6, window_bounds = array<i64: 1, 32>}, {pipeline_mode = #tpu.pipeline_mode<synchronous>, transform_indices = @transform_7, window_bounds = array<i64: 32, 32>}, {pipeline_mode = #tpu.pipeline_mode<synchronous>, transform_indices = @transform_8, window_bounds = array<i64: 1, 32>}, {pipeline_mode = #tpu.pipeline_mode<synchronous>, transform_indices = @transform_9, window_bounds = array<i64: 1, 32>}, {pipeline_mode = #tpu.pipeline_mode<synchronous>, transform_indices = @transform_10, window_bounds = array<i64: 1, 1>}, {transform_indices = @transform_11, window_bounds = array<i64: 1, 1, 16>}]} {
    %c0 = arith.constant 0 : index
    %c0_0 = arith.constant 0 : index
    %c0_1 = arith.constant 0 : index
    %0 = vector.load %arg1[%c0, %c0_0, %c0_1] : memref<1x8x4xf32, #tpu.memory_space<vmem>>, vector<1x8x4xf32>
    %1 = vector.shape_cast %0 : vector<1x8x4xf32> to vector<1x8x4x1xf32>
    %c0_2 = arith.constant 0 : index
    %c0_3 = arith.constant 0 : index
    %2 = vector.load %arg2[%c0_2, %c0_3] : memref<1x32xf32, #tpu.memory_space<vmem>>, vector<1x32xf32>
    %3 = vector.shape_cast %2 : vector<1x32xf32> to vector<1x1x1x32xf32>
    %4 = vector.broadcast %1 : vector<1x8x4x1xf32> to vector<1x8x4x32xf32>
    %5 = vector.broadcast %3 : vector<1x1x1x32xf32> to vector<1x8x4x32xf32>
    %6 = arith.mulf %4, %5 : vector<1x8x4x32xf32>
    %c0_4 = arith.constant 0 : index
    %c0_5 = arith.constant 0 : index
    %7 = vector.load %arg3[%c0_4, %c0_5] : memref<1x32xf32, #tpu.memory_space<vmem>>, vector<1x32xf32>
    %8 = vector.shape_cast %7 : vector<1x32xf32> to vector<1x1x1x32xf32>
    %9 = vector.broadcast %8 : vector<1x1x1x32xf32> to vector<1x8x4x32xf32>
    %10 = arith.addf %6, %9 : vector<1x8x4x32xf32>
    %cst = arith.constant 0.000000e+00 : f32
    %11 = vector.broadcast %cst : f32 to vector<1x8x4x32xf32>
    %12 = arith.maximumf %10, %11 : vector<1x8x4x32xf32>
    %13 = vector.shape_cast %12 : vector<1x8x4x32xf32> to vector<32x32xf32>
    %c0_6 = arith.constant 0 : index
    %c0_7 = arith.constant 0 : index
    %14 = vector.load %arg4[%c0_6, %c0_7] : memref<32x32xf32, #tpu.memory_space<vmem>>, vector<32x32xf32>
    %cst_8 = arith.constant dense<0.000000e+00> : vector<32x32xf32>
    %15 = tpu.matmul %13, %14, %cst_8 {dimension_numbers = #tpu.dot_dimension_numbers<[1], [0], [0], [1], [0, 0, 1, 1], [], []>} : vector<32x32xf32>, vector<32x32xf32>, vector<32x32xf32> -> vector<32x32xf32>
    %c0_9 = arith.constant 0 : index
    %c0_10 = arith.constant 0 : index
    %16 = vector.load %arg5[%c0_9, %c0_10] : memref<1x32xf32, #tpu.memory_space<vmem>>, vector<1x32xf32>
    %17 = vector.broadcast %16 : vector<1x32xf32> to vector<32x32xf32>
    %18 = arith.addf %15, %17 : vector<32x32xf32>
    %c0_11 = arith.constant 0 : index
    %c0_12 = arith.constant 0 : index
    %19 = vector.load %arg6[%c0_11, %c0_12] : memref<32x32xf32, #tpu.memory_space<vmem>>, vector<32x32xf32>
    %cst_13 = arith.constant dense<0.000000e+00> : vector<32x32xf32>
    %20 = tpu.matmul %13, %19, %cst_13 {dimension_numbers = #tpu.dot_dimension_numbers<[1], [0], [0], [1], [0, 0, 1, 1], [], []>} : vector<32x32xf32>, vector<32x32xf32>, vector<32x32xf32> -> vector<32x32xf32>
    %c0_14 = arith.constant 0 : index
    %c0_15 = arith.constant 0 : index
    %21 = vector.load %arg7[%c0_14, %c0_15] : memref<1x32xf32, #tpu.memory_space<vmem>>, vector<1x32xf32>
    %22 = vector.broadcast %21 : vector<1x32xf32> to vector<32x32xf32>
    %23 = arith.addf %20, %22 : vector<32x32xf32>
    %24 = vector.shape_cast %18 : vector<32x32xf32> to vector<1x8x4x32xf32>
    %25 = vector.shape_cast %23 : vector<32x32xf32> to vector<1x8x4x32xf32>
    %26 = vector.shape_cast %24 : vector<1x8x4x32xf32> to vector<1x8x4x1x32xf32>
    %27 = vector.shape_cast %25 : vector<1x8x4x32xf32> to vector<1x8x1x4x32xf32>
    %28 = vector.broadcast %26 : vector<1x8x4x1x32xf32> to vector<1x8x4x4x32xf32>
    %29 = vector.broadcast %27 : vector<1x8x1x4x32xf32> to vector<1x8x4x4x32xf32>
    %30 = arith.mulf %28, %29 : vector<1x8x4x4x32xf32>
    %cst_16 = arith.constant dense<0.000000e+00> : vector<1x4x4x32xf32>
    %31 = vector.multi_reduction <add>, %30, %cst_16 [1] : vector<1x8x4x4x32xf32> to vector<1x4x4x32xf32>
    %cst_17 = arith.constant 0.353553385 : f32
    %32 = vector.broadcast %cst_17 : f32 to vector<1x4x4x32xf32>
    %33 = arith.mulf %31, %32 : vector<1x4x4x32xf32>
    %34 = vector.shape_cast %33 : vector<1x4x4x32xf32> to vector<16x32xf32>
    %c0_18 = arith.constant 0 : index
    %c0_19 = arith.constant 0 : index
    %35 = vector.load %arg8[%c0_18, %c0_19] : memref<32x32xf32, #tpu.memory_space<vmem>>, vector<32x32xf32>
    %cst_20 = arith.constant dense<0.000000e+00> : vector<16x32xf32>
    %36 = tpu.matmul %34, %35, %cst_20 {dimension_numbers = #tpu.dot_dimension_numbers<[1], [0], [0], [1], [0, 0, 1, 1], [], []>} : vector<16x32xf32>, vector<32x32xf32>, vector<16x32xf32> -> vector<16x32xf32>
    %c0_21 = arith.constant 0 : index
    %c0_22 = arith.constant 0 : index
    %37 = vector.load %arg9[%c0_21, %c0_22] : memref<1x32xf32, #tpu.memory_space<vmem>>, vector<1x32xf32>
    %38 = vector.broadcast %37 : vector<1x32xf32> to vector<16x32xf32>
    %39 = arith.addf %36, %38 : vector<16x32xf32>
    %cst_23 = arith.constant 0.000000e+00 : f32
    %40 = vector.broadcast %cst_23 : f32 to vector<16x32xf32>
    %41 = arith.maximumf %39, %40 : vector<16x32xf32>
    %c0_24 = arith.constant 0 : index
    %c0_25 = arith.constant 0 : index
    %42 = vector.load %arg10[%c0_24, %c0_25] : memref<1x32xf32, #tpu.memory_space<vmem>>, vector<1x32xf32>
    %43 = vector.broadcast %42 : vector<1x32xf32> to vector<16x32xf32>
    %44 = arith.mulf %41, %43 : vector<16x32xf32>
    %cst_26 = arith.constant dense<0.000000e+00> : vector<16xf32>
    %45 = vector.multi_reduction <add>, %44, %cst_26 [1] : vector<16x32xf32> to vector<16xf32>
    %46 = vector.shape_cast %45 : vector<16xf32> to vector<16x1xf32>
    %c0_27 = arith.constant 0 : index
    %c0_28 = arith.constant 0 : index
    %47 = vector.load %arg11[%c0_27, %c0_28] : memref<1x1xf32, #tpu.memory_space<vmem>>, vector<1x1xf32>
    %48 = vector.broadcast %47 : vector<1x1xf32> to vector<16x1xf32>
    %49 = arith.addf %46, %48 : vector<16x1xf32>
    %50 = tpu.transpose %49, [1, 0] : vector<16x1xf32> -> vector<1x16xf32>
    %c0_29 = arith.constant 0 : index
    %c0_30 = arith.constant 0 : index
    %c0_31 = arith.constant 0 : index
    %51 = vector.load %arg12[%c0_29, %c0_30, %c0_31] : memref<1x1x16xf32, #tpu.memory_space<vmem>>, vector<1x1x16xf32>
    %52 = vector.shape_cast %51 : vector<1x1x16xf32> to vector<1x16xf32>
    %53 = vector.shape_cast %50 : vector<1x16xf32> to vector<1x1x16xf32>
    tpu.vector_store %arg12[%c0_29, %c0_30, %c0_31], %53 {strides = array<i32>} : memref<1x1x16xf32, #tpu.memory_space<vmem>>, vector<1x1x16xf32>,
    return
  }
  func.func @transform_0(%arg0: i32) -> (i32, i32, i32) {
    %c0_i32 = arith.constant 0 : i32
    %c0_i32_0 = arith.constant 0 : i32
    %c0_i32_1 = arith.constant 0 : i32
    return %arg0, %c0_i32, %c0_i32_0 : i32, i32, i32
  }
  func.func @transform_1(%arg0: i32) -> (i32, i32) {
    %c0_i32 = arith.constant 0 : i32
    %c0_i32_0 = arith.constant 0 : i32
    %c0_i32_1 = arith.constant 0 : i32
    return %c0_i32, %c0_i32_0 : i32, i32
  }
  func.func @transform_2(%arg0: i32) -> (i32, i32) {
    %c0_i32 = arith.constant 0 : i32
    %c0_i32_0 = arith.constant 0 : i32
    %c0_i32_1 = arith.constant 0 : i32
    return %c0_i32, %c0_i32_0 : i32, i32
  }
  func.func @transform_3(%arg0: i32) -> (i32, i32) {
    %c0_i32 = arith.constant 0 : i32
    %c0_i32_0 = arith.constant 0 : i32
    %c0_i32_1 = arith.constant 0 : i32
    return %c0_i32, %c0_i32_0 : i32, i32
  }
  func.func @transform_4(%arg0: i32) -> (i32, i32) {
    %c0_i32 = arith.constant 0 : i32
    %c0_i32_0 = arith.constant 0 : i32
    %c0_i32_1 = arith.constant 0 : i32
    return %c0_i32, %c0_i32_0 : i32, i32
  }
  func.func @transform_5(%arg0: i32) -> (i32, i32) {
    %c0_i32 = arith.constant 0 : i32
    %c0_i32_0 = arith.constant 0 : i32
    %c0_i32_1 = arith.constant 0 : i32
    return %c0_i32, %c0_i32_0 : i32, i32
  }
  func.func @transform_6(%arg0: i32) -> (i32, i32) {
    %c0_i32 = arith.constant 0 : i32
    %c0_i32_0 = arith.constant 0 : i32
    %c0_i32_1 = arith.constant 0 : i32
    return %c0_i32, %c0_i32_0 : i32, i32
  }
  func.func @transform_7(%arg0: i32) -> (i32, i32) {
    %c0_i32 = arith.constant 0 : i32
    %c0_i32_0 = arith.constant 0 : i32
    %c0_i32_1 = arith.constant 0 : i32
    return %c0_i32, %c0_i32_0 : i32, i32
  }
  func.func @transform_8(%arg0: i32) -> (i32, i32) {
    %c0_i32 = arith.constant 0 : i32
    %c0_i32_0 = arith.constant 0 : i32
    %c0_i32_1 = arith.constant 0 : i32
    return %c0_i32, %c0_i32_0 : i32, i32
  }
  func.func @transform_9(%arg0: i32) -> (i32, i32) {
    %c0_i32 = arith.constant 0 : i32
    %c0_i32_0 = arith.constant 0 : i32
    %c0_i32_1 = arith.constant 0 : i32
    return %c0_i32, %c0_i32_0 : i32, i32
  }
  func.func @transform_10(%arg0: i32) -> (i32, i32) {
    %c0_i32 = arith.constant 0 : i32
    %c0_i32_0 = arith.constant 0 : i32
    %c0_i32_1 = arith.constant 0 : i32
    return %c0_i32, %c0_i32_0 : i32, i32
  }
  func.func @transform_11(%arg0: i32) -> (i32, i32, i32) {
    %c0_i32 = arith.constant 0 : i32
    %c0_i32_0 = arith.constant 0 : i32
    %c0_i32_1 = arith.constant 0 : i32
    return %arg0, %c0_i32, %c0_i32_0 : i32, i32, i32
  }
}

</mosaic_0001>

<llo_original>
// kernel: tpu_custom_call.1
$region0: #{tpu_custom_call.1}
  #allocation0 [shape = 'u32[]', space=smem, size = 0x4, offset = 0x4, fixed_abs, tag = 'smem constant byte address 0x4 - core index']
  #allocation1 [shape = 'u32[144,128]{1,0:T(1,128)}', space=vmem, size = 0x12000, scoped, tag = 'internal scratch']
  #allocation2 [shape = 'f32[1,1]{1,0:T(1,128)S(1)}', space=vmem, size = 0x200, scoped, tag = 'scoped memory for tpu_custom_call.1']
  %s0 = inlined_call_operand.vmem [shape: f32[2,8,4], index: 0, kind: input, shape index: {}]
  %s1 = inlined_call_operand.vmem [shape: f32[1,32], index: 1, kind: input, shape index: {}]
  %s2 = inlined_call_operand.vmem [shape: f32[1,32], index: 2, kind: input, shape index: {}]
  %s3 = inlined_call_operand.vmem [shape: f32[32,32], index: 3, kind: input, shape index: {}]
  %s4 = inlined_call_operand.vmem [shape: f32[1,32], index: 4, kind: input, shape index: {}]
  %s5 = inlined_call_operand.hbm [shape: f32[32,32], index: 5, kind: input, shape index: {}]
  %s6 = inlined_call_operand.vmem [shape: f32[1,32], index: 6, kind: input, shape index: {}]
  %s7 = inlined_call_operand.hbm [shape: f32[32,32], index: 7, kind: input, shape index: {}]
  %s8 = inlined_call_operand.vmem [shape: f32[1,32], index: 8, kind: input, shape index: {}]
  %s9 = inlined_call_operand.vmem [shape: f32[1,32], index: 9, kind: input, shape index: {}]
  %s10 = inlined_call_operand.<no memory space> [shape: f32[1,1], index: 10, kind: input, shape index: {}]
  %s11 = inlined_call_operand.hbm [shape: f32[2,1,16], index: 11, kind: output, shape index: {}]
  %s12 = sld [smem:[#allocation0]]
  $region85: #{tpu_custom_call.1} parent=0
    _
  %s14 = ssub.s32 1, %s12
  %s15 = scalar_select 0, %s14, %s12
  %v16 = vstv %s10
  %17 = vst [vmem:[#allocation2] sm:$0x1] %v16
  $region1: #{tpu_custom_call.1} parent=0
    #allocation3 [shape = 'u8[16384]{0}', space=vmem, size = 0x4000, scoped, tag = 'input window, operand 5, single buffered']
    #allocation4 [shape = 's32[2]{0}', space=sflag, size = 0x8, scoped, tag = 'scoped memory for tpu_custom_call.1']
    #allocation5 [shape = 's32[2]{0}', space=sflag, size = 0x8, scoped, tag = 'scoped memory for tpu_custom_call.1']
    #allocation6 [shape = 'u8[16384]{0}', space=vmem, size = 0x4000, scoped, tag = 'input window, operand 7, single buffered']
    #allocation7 [shape = 's32[1]{0}', space=sflag, size = 0x4, scoped, tag = 'scoped memory for tpu_custom_call.1']
    #allocation8 [shape = 'u8[1024]{0}', space=vmem, size = 0x400, scoped, tag = 'output window, operand 0']
    %18 = vsyncpa [#allocation4], 0
    %19 = vsyncpa [#allocation7], 0
    %20 = vsyncpa [#allocation5], 0
    %s21 = scalar_lea.sflag [#allocation5], 1
    %22 = vsyncpa %s21, 0
    loop: start=0, step=1, limit=4
    $region2: #{tpu_custom_call.1} parent=1 // loop_pre_header
      _
    $region3: #{tpu_custom_call.1} parent=1 // loop_header
      %s24 = sphi 0, %s28
      %p25 = scmp.ge.s32.totalorder %s24, 4
      %s34 = sphi 0, %s36
      %s37 = sphi 0, %s34
      %s38 = sphi 0, %s37
      %s54 = sphi 0, %s38
      %s58 = sphi 0, %s58
      %s60 = sphi 0, %s58
      %s61 = sphi 0, %s60
      %s75 = sphi 0, %s61
      %s79 = sphi 0, %s79
      %s81 = sphi 0, %s79
      %s82 = sphi 0, %s81
      %s96 = sphi 0, %s82
      %s100 = sphi 0, %s100
      %s102 = sphi 0, %s100
      %s103 = sphi 0, %s102
      %s117 = sphi 0, %s103
      %s121 = sphi 0, %s121
      %s123 = sphi 0, %s121
      %s124 = sphi 0, %s123
      %s138 = sphi 0, %s124
      %s142 = sphi 0, %s142
      %s144 = sphi 0, %s142
      %s145 = sphi 0, %s144
      %s159 = sphi 0, %s145
      %s163 = sphi 0, %s163
      %s165 = sphi 0, %s163
      %s166 = sphi 0, %s165
      %s180 = sphi 0, %s166
      %s184 = sphi 0, %s184
      %s186 = sphi 0, %s184
      %s187 = sphi 0, %s186
      %s201 = sphi 0, %s187
      %s205 = sphi 0, %s205
      %s207 = sphi 0, %s205
      %s208 = sphi 0, %s207
      %s222 = sphi 0, %s208
      %s226 = sphi 0, %s226
      %s228 = sphi 0, %s226
      %s229 = sphi 0, %s228
      %s243 = sphi 0, %s229
      %s247 = sphi 0, %s247
      %s249 = sphi 0, %s247
      %s250 = sphi 0, %s249
      %s264 = sphi 0, %s250
      %s270 = sphi 0, %s272
      %s273 = sphi 0, %s270
      %s274 = sphi 0, %s273
      %s290 = sphi 0, %s274
    $region4: #{tpu_custom_call.1} parent=1 // loop_header_branch
      %27 = sbr.rel (%p25) target = $region8
    $region5: #{tpu_custom_call.1} parent=1 // loop_body
      %s29 = ssub.s32 %s24, 1
      %s30 = ssub.s32 %s24, 2
      %s31 = sadd.s32 %s24, 1
      %s32 = ssub.s32 %s24, %s31
      %p33 = scmp.eq.s32.totalorder %s32, 0
      %s35 = sadd.s32 %s34, 1
      %s36 = scalar_select %p33, %s34, %s35
      %p39 = pneg %p33
      %p40 = scmp.eq.s32.totalorder %s24, 1
      %p41 = por %p39, %p40
      %p42 = scmp.ne.s32.totalorder %s34, %s37
      %p43 = scmp.eq.s32.totalorder %s24, 0
      %p44 = por %p42, %p43
      %p45 = scmp.ne.s32.totalorder %s34, %s37
      %p46 = scmp.eq.s32.totalorder %s29, 1
      %p47 = por %p45, %p46
      %p48 = scmp.ne.s32.totalorder %s37, %s38
      %p49 = scmp.eq.s32.totalorder %s29, 0
      %p50 = por %p48, %p49
      %p51 = scmp.ne.s32.totalorder %s37, %s38
      %p52 = scmp.eq.s32.totalorder %s30, 1
      %p53 = por %p51, %p52
      %p55 = scmp.ne.s32.totalorder %s38, %s54
      %p56 = scmp.eq.s32.totalorder %s30, 0
      %p57 = por %p55, %p56
      %s59 = sadd.s32 %s58, 1
      %p62 = scmp.eq.s32.totalorder %s24, 1
      %p63 = scmp.ne.s32.totalorder %s58, %s60
      %p64 = scmp.eq.s32.totalorder %s24, 0
      %p65 = por %p63, %p64
      %p66 = scmp.ne.s32.totalorder %s58, %s60
      %p67 = scmp.eq.s32.totalorder %s29, 1
      %p68 = por %p66, %p67
      %p69 = scmp.ne.s32.totalorder %s60, %s61
      %p70 = scmp.eq.s32.totalorder %s29, 0
      %p71 = por %p69, %p70
      %p72 = scmp.ne.s32.totalorder %s60, %s61
      %p73 = scmp.eq.s32.totalorder %s30, 1
      %p74 = por %p72, %p73
      %p76 = scmp.ne.s32.totalorder %s61, %s75
      %p77 = scmp.eq.s32.totalorder %s30, 0
      %p78 = por %p76, %p77
      %s80 = sadd.s32 %s79, 1
      %p83 = scmp.eq.s32.totalorder %s24, 1
      %p84 = scmp.ne.s32.totalorder %s79, %s81
      %p85 = scmp.eq.s32.totalorder %s24, 0
      %p86 = por %p84, %p85
      %p87 = scmp.ne.s32.totalorder %s79, %s81
      %p88 = scmp.eq.s32.totalorder %s29, 1
      %p89 = por %p87, %p88
      %p90 = scmp.ne.s32.totalorder %s81, %s82
      %p91 = scmp.eq.s32.totalorder %s29, 0
      %p92 = por %p90, %p91
      %p93 = scmp.ne.s32.totalorder %s81, %s82
      %p94 = scmp.eq.s32.totalorder %s30, 1
      %p95 = por %p93, %p94
      %p97 = scmp.ne.s32.totalorder %s82, %s96
      %p98 = scmp.eq.s32.totalorder %s30, 0
      %p99 = por %p97, %p98
      %s101 = sadd.s32 %s100, 1
      %p104 = scmp.eq.s32.totalorder %s24, 1
      %p105 = scmp.ne.s32.totalorder %s100, %s102
      %p106 = scmp.eq.s32.totalorder %s24, 0
      %p107 = por %p105, %p106
      %p108 = scmp.ne.s32.totalorder %s100, %s102
      %p109 = scmp.eq.s32.totalorder %s29, 1
      %p110 = por %p108, %p109
      %p111 = scmp.ne.s32.totalorder %s102, %s103
      %p112 = scmp.eq.s32.totalorder %s29, 0
      %p113 = por %p111, %p112
      %p114 = scmp.ne.s32.totalorder %s102, %s103
      %p115 = scmp.eq.s32.totalorder %s30, 1
      %p116 = por %p114, %p115
      %p118 = scmp.ne.s32.totalorder %s103, %s117
      %p119 = scmp.eq.s32.totalorder %s30, 0
      %p120 = por %p118, %p119
      %s122 = sadd.s32 %s121, 1
      %p125 = scmp.eq.s32.totalorder %s24, 1
      %p126 = scmp.ne.s32.totalorder %s121, %s123
      %p127 = scmp.eq.s32.totalorder %s24, 0
      %p128 = por %p126, %p127
      %p129 = scmp.ne.s32.totalorder %s121, %s123
      %p130 = scmp.eq.s32.totalorder %s29, 1
      %p131 = por %p129, %p130
      %p132 = scmp.ne.s32.totalorder %s123, %s124
      %p133 = scmp.eq.s32.totalorder %s29, 0
      %p134 = por %p132, %p133
      %p135 = scmp.ne.s32.totalorder %s123, %s124
      %p136 = scmp.eq.s32.totalorder %s30, 1
      %p137 = por %p135, %p136
      %p139 = scmp.ne.s32.totalorder %s124, %s138
      %p140 = scmp.eq.s32.totalorder %s30, 0
      %p141 = por %p139, %p140
      %s143 = sadd.s32 %s142, 1
      %p146 = scmp.eq.s32.totalorder %s24, 1
      %p147 = scmp.ne.s32.totalorder %s142, %s144
      %p148 = scmp.eq.s32.totalorder %s24, 0
      %p149 = por %p147, %p148
      %p150 = scmp.ne.s32.totalorder %s142, %s144
      %p151 = scmp.eq.s32.totalorder %s29, 1
      %p152 = por %p150, %p151
      %p153 = scmp.ne.s32.totalorder %s144, %s145
      %p154 = scmp.eq.s32.totalorder %s29, 0
      %p155 = por %p153, %p154
      %p156 = scmp.ne.s32.totalorder %s144, %s145
      %p157 = scmp.eq.s32.totalorder %s30, 1
      %p158 = por %p156, %p157
      %p160 = scmp.ne.s32.totalorder %s145, %s159
      %p161 = scmp.eq.s32.totalorder %s30, 0
      %p162 = por %p160, %p161
      %s164 = sadd.s32 %s163, 1
      %p167 = scmp.eq.s32.totalorder %s24, 1
      %p168 = scmp.ne.s32.totalorder %s163, %s165
      %p169 = scmp.eq.s32.totalorder %s24, 0
      %p170 = por %p168, %p169
      %p171 = scmp.ne.s32.totalorder %s163, %s165
      %p172 = scmp.eq.s32.totalorder %s29, 1
      %p173 = por %p171, %p172
      %p174 = scmp.ne.s32.totalorder %s165, %s166
      %p175 = scmp.eq.s32.totalorder %s29, 0
      %p176 = por %p174, %p175
      %p177 = scmp.ne.s32.totalorder %s165, %s166
      %p178 = scmp.eq.s32.totalorder %s30, 1
      %p179 = por %p177, %p178
      %p181 = scmp.ne.s32.totalorder %s166, %s180
      %p182 = scmp.eq.s32.totalorder %s30, 0
      %p183 = por %p181, %p182
      %s185 = sadd.s32 %s184, 1
      %p188 = scmp.eq.s32.totalorder %s24, 1
      %p189 = scmp.ne.s32.totalorder %s184, %s186
      %p190 = scmp.eq.s32.totalorder %s24, 0
      %p191 = por %p189, %p190
      %p192 = scmp.ne.s32.totalorder %s184, %s186
      %p193 = scmp.eq.s32.totalorder %s29, 1
      %p194 = por %p192, %p193
      %p195 = scmp.ne.s32.totalorder %s186, %s187
      %p196 = scmp.eq.s32.totalorder %s29, 0
      %p197 = por %p195, %p196
      %p198 = scmp.ne.s32.totalorder %s186, %s187
      %p199 = scmp.eq.s32.totalorder %s30, 1
      %p200 = por %p198, %p199
      %p202 = scmp.ne.s32.totalorder %s187, %s201
      %p203 = scmp.eq.s32.totalorder %s30, 0
      %p204 = por %p202, %p203
      %s206 = sadd.s32 %s205, 1
      %p209 = scmp.eq.s32.totalorder %s24, 1
      %p210 = scmp.ne.s32.totalorder %s205, %s207
      %p211 = scmp.eq.s32.totalorder %s24, 0
      %p212 = por %p210, %p211
      %p213 = scmp.ne.s32.totalorder %s205, %s207
      %p214 = scmp.eq.s32.totalorder %s29, 1
      %p215 = por %p213, %p214
      %p216 = scmp.ne.s32.totalorder %s207, %s208
      %p217 = scmp.eq.s32.totalorder %s29, 0
      %p218 = por %p216, %p217
      %p219 = scmp.ne.s32.totalorder %s207, %s208
      %p220 = scmp.eq.s32.totalorder %s30, 1
      %p221 = por %p219, %p220
      %p223 = scmp.ne.s32.totalorder %s208, %s222
      %p224 = scmp.eq.s32.totalorder %s30, 0
      %p225 = por %p223, %p224
      %s227 = sadd.s32 %s226, 1
      %p230 = scmp.eq.s32.totalorder %s24, 1
      %p231 = scmp.ne.s32.totalorder %s226, %s228
      %p232 = scmp.eq.s32.totalorder %s24, 0
      %p233 = por %p231, %p232
      %p234 = scmp.ne.s32.totalorder %s226, %s228
      %p235 = scmp.eq.s32.totalorder %s29, 1
      %p236 = por %p234, %p235
      %p237 = scmp.ne.s32.totalorder %s228, %s229
      %p238 = scmp.eq.s32.totalorder %s29, 0
      %p239 = por %p237, %p238
      %p240 = scmp.ne.s32.totalorder %s228, %s229
      %p241 = scmp.eq.s32.totalorder %s30, 1
      %p242 = por %p240, %p241
      %p244 = scmp.ne.s32.totalorder %s229, %s243
      %p245 = scmp.eq.s32.totalorder %s30, 0
      %p246 = por %p244, %p245
      %s248 = sadd.s32 %s247, 1
      %p251 = scmp.eq.s32.totalorder %s24, 1
      %p252 = scmp.ne.s32.totalorder %s247, %s249
      %p253 = scmp.eq.s32.totalorder %s24, 0
      %p254 = por %p252, %p253
      %p255 = scmp.ne.s32.totalorder %s247, %s249
      %p256 = scmp.eq.s32.totalorder %s29, 1
      %p257 = por %p255, %p256
      %p258 = scmp.ne.s32.totalorder %s249, %s250
      %p259 = scmp.eq.s32.totalorder %s29, 0
      %p260 = por %p258, %p259
      %p261 = scmp.ne.s32.totalorder %s249, %s250
      %p262 = scmp.eq.s32.totalorder %s30, 1
      %p263 = por %p261, %p262
      %p265 = scmp.ne.s32.totalorder %s250, %s264
      %p266 = scmp.eq.s32.totalorder %s30, 0
      %p267 = por %p265, %p266
      %s268 = ssub.s32 %s24, %s31
      %p269 = scmp.eq.s32.totalorder %s268, 0
      %s271 = sadd.s32 %s270, 1
      %s272 = scalar_select %p269, %s270, %s271
      %p275 = pneg %p269
      %p276 = scmp.eq.s32.totalorder %s24, 1
      %p277 = por %p275, %p276
      %p278 = scmp.ne.s32.totalorder %s270, %s273
      %p279 = scmp.eq.s32.totalorder %s24, 0
      %p280 = por %p278, %p279
      %p281 = scmp.ne.s32.totalorder %s270, %s273
      %p282 = scmp.eq.s32.totalorder %s29, 1
      %p283 = por %p281, %p282
      %p284 = scmp.ne.s32.totalorder %s273, %s274
      %p285 = scmp.eq.s32.totalorder %s29, 0
      %p286 = por %p284, %p285
      %p287 = scmp.ne.s32.totalorder %s273, %s274
      %p288 = scmp.eq.s32.totalorder %s30, 1
      %p289 = por %p287, %p288
      %p291 = scmp.ne.s32.totalorder %s274, %s290
      %p292 = scmp.eq.s32.totalorder %s30, 0
      %p293 = por %p291, %p292
      %p294 = scmp.le.s32.totalorder 1, %s24
      %p295 = scmp.lt.s32.totalorder %s24, 3
      %p296 = pnand %p294, %p295
      %p297 = pneg %p296
      // Predicated region
      $region9: #{tpu_custom_call.1} parent=5 // pred_check
        _
      $region10: #{tpu_custom_call.1} parent=5 // pred_check_branch
        %299 = sbr.rel (%p296) target = $region12
      $region11: #{tpu_custom_call.1} parent=5 // pred_region
        %s300 = ssub.s32 %s24, 1
        // Predicated region
        $region13: #{tpu_custom_call.1} parent=11 // pred_check
          %p301 = pneg %p71
        $region14: #{tpu_custom_call.1} parent=11 // pred_check_branch
          %303 = sbr.rel (%p301) target = $region16
        $region15: #{tpu_custom_call.1} parent=11 // pred_region
          _
        $region16: #{tpu_custom_call.1} parent=11 // pred_fallthru
          _
        // Predicated region
        $region17: #{tpu_custom_call.1} parent=11 // pred_check
          %p304 = pneg %p92
        $region18: #{tpu_custom_call.1} parent=11 // pred_check_branch
          %306 = sbr.rel (%p304) target = $region20
        $region19: #{tpu_custom_call.1} parent=11 // pred_region
          _
        $region20: #{tpu_custom_call.1} parent=11 // pred_fallthru
          _
        // Predicated region
        $region21: #{tpu_custom_call.1} parent=11 // pred_check
          %p307 = pneg %p113
        $region22: #{tpu_custom_call.1} parent=11 // pred_check_branch
          %309 = sbr.rel (%p307) target = $region24
        $region23: #{tpu_custom_call.1} parent=11 // pred_region
          _
        $region24: #{tpu_custom_call.1} parent=11 // pred_fallthru
          _
        // Predicated region
        $region25: #{tpu_custom_call.1} parent=11 // pred_check
          %p310 = pneg %p134
        $region26: #{tpu_custom_call.1} parent=11 // pred_check_branch
          %312 = sbr.rel (%p310) target = $region28
        $region27: #{tpu_custom_call.1} parent=11 // pred_region
          _
        $region28: #{tpu_custom_call.1} parent=11 // pred_fallthru
          _
        // Predicated region
        $region29: #{tpu_custom_call.1} parent=11 // pred_check
          %p313 = pneg %p155
        $region30: #{tpu_custom_call.1} parent=11 // pred_check_branch
          %315 = sbr.rel (%p313) target = $region32
        $region31: #{tpu_custom_call.1} parent=11 // pred_region
          %s317 = ssub.s32 512, 512
          %318 = vsyncadd [#allocation4], %s317
          %s319 = sshll.u32 [#allocation3], 4
          %s320 = int_to_ptr.vmem [resolvable:$true] %s319
          %325 = dma.hbm_to_vmem [thread:$0]  %s5, 512, %s320, [#allocation4], 128, 128, 8
        $region32: #{tpu_custom_call.1} parent=11 // pred_fallthru
          _
        // Predicated region
        $region33: #{tpu_custom_call.1} parent=11 // pred_check
          %p326 = pneg %p176
        $region34: #{tpu_custom_call.1} parent=11 // pred_check_branch
          %328 = sbr.rel (%p326) target = $region36
        $region35: #{tpu_custom_call.1} parent=11 // pred_region
          _
        $region36: #{tpu_custom_call.1} parent=11 // pred_fallthru
          _
        // Predicated region
        $region37: #{tpu_custom_call.1} parent=11 // pred_check
          %p329 = pneg %p197
        $region38: #{tpu_custom_call.1} parent=11 // pred_check_branch
          %331 = sbr.rel (%p329) target = $region40
        $region39: #{tpu_custom_call.1} parent=11 // pred_region
          %s333 = ssub.s32 512, 512
          %334 = vsyncadd [#allocation7], %s333
          %s335 = sshll.u32 [#allocation6], 4
          %s336 = int_to_ptr.vmem [resolvable:$true] %s335
          %341 = dma.hbm_to_vmem [thread:$0]  %s7, 512, %s336, [#allocation7], 128, 128, 8
        $region40: #{tpu_custom_call.1} parent=11 // pred_fallthru
          _
        // Predicated region
        $region41: #{tpu_custom_call.1} parent=11 // pred_check
          %p342 = pneg %p218
        $region42: #{tpu_custom_call.1} parent=11 // pred_check_branch
          %344 = sbr.rel (%p342) target = $region44
        $region43: #{tpu_custom_call.1} parent=11 // pred_region
          _
        $region44: #{tpu_custom_call.1} parent=11 // pred_fallthru
          _
        // Predicated region
        $region45: #{tpu_custom_call.1} parent=11 // pred_check
          %p345 = pneg %p239
        $region46: #{tpu_custom_call.1} parent=11 // pred_check_branch
          %347 = sbr.rel (%p345) target = $region48
        $region47: #{tpu_custom_call.1} parent=11 // pred_region
          _
        $region48: #{tpu_custom_call.1} parent=11 // pred_fallthru
          _
        // Predicated region
        $region49: #{tpu_custom_call.1} parent=11 // pred_check
          %p348 = pneg %p260
        $region50: #{tpu_custom_call.1} parent=11 // pred_check_branch
          %350 = sbr.rel (%p348) target = $region52
        $region51: #{tpu_custom_call.1} parent=11 // pred_region
          _
        $region52: #{tpu_custom_call.1} parent=11 // pred_fallthru
          _
      $region12: #{tpu_custom_call.1} parent=5 // pred_fallthru
        _
      %p351 = scmp.lt.s32.totalorder %s24, 2
      // Predicated region
      $region53: #{tpu_custom_call.1} parent=5 // pred_check
        %p352 = pneg %p351
      $region54: #{tpu_custom_call.1} parent=5 // pred_check_branch
        %354 = sbr.rel (%p352) target = $region56
      $region55: #{tpu_custom_call.1} parent=5 // pred_region
        // Predicated region
        $region57: #{tpu_custom_call.1} parent=55 // pred_check
          %p355 = pneg %p44
        $region58: #{tpu_custom_call.1} parent=55 // pred_check_branch
          %357 = sbr.rel (%p355) target = $region60
        $region59: #{tpu_custom_call.1} parent=55 // pred_region
          %p358 = scmp.lt.s32.totalorder %s24, 1
          %s359 = scalar_select %p358, %s24, 1
          %s360 = smul.addr %s359, 8
          %s361 = scalar_lea.vmem %s0, %s360
        $region60: #{tpu_custom_call.1} parent=55 // pred_fallthru
          _
      $region56: #{tpu_custom_call.1} parent=5 // pred_fallthru
        _
      %p362 = scmp.le.s32.totalorder 1, %s24
      %p363 = scmp.lt.s32.totalorder %s24, 3
      %p364 = pnand %p362, %p363
      %p365 = pneg %p364
      // Predicated region
      $region61: #{tpu_custom_call.1} parent=5 // pred_check
        _
      $region62: #{tpu_custom_call.1} parent=5 // pred_check_branch
        %367 = sbr.rel (%p364) target = $region64
      $region63: #{tpu_custom_call.1} parent=5 // pred_region
        %s368 = ssub.s32 %s24, 1
        // Predicated region
        $region65: #{tpu_custom_call.1} parent=63 // pred_check
          %p369 = pneg %p155
        $region66: #{tpu_custom_call.1} parent=63 // pred_check_branch
          %371 = sbr.rel (%p369) target = $region68
        $region67: #{tpu_custom_call.1} parent=63 // pred_region
          %372 = dma.done [#allocation4], 512
        $region68: #{tpu_custom_call.1} parent=63 // pred_fallthru
          _
        // Predicated region
        $region69: #{tpu_custom_call.1} parent=63 // pred_check
          %p373 = pneg %p197
        $region70: #{tpu_custom_call.1} parent=63 // pred_check_branch
          %375 = sbr.rel (%p373) target = $region72
        $region71: #{tpu_custom_call.1} parent=63 // pred_region
          %376 = dma.done [#allocation7], 512
        $region72: #{tpu_custom_call.1} parent=63 // pred_fallthru
          _
        %p377 = scmp.lt.s32.totalorder %s29, 1
        %s378 = scalar_select %p377, %s29, 1
        %s379 = smul.addr %s378, 8
        %s380 = scalar_lea.vmem %s0, %s379
        %p381 = pneg %p50
        %p382 = pneg %p47
        %p383 = pneg %p71
        %p384 = pneg %p68
        %p385 = pneg %p92
        %p386 = pneg %p89
        %p387 = pneg %p113
        %p388 = pneg %p110
        %p389 = pneg %p134
        %p390 = pneg %p131
        %p391 = pneg %p155
        %p392 = pneg %p152
        %p393 = pneg %p176
        %p394 = pneg %p173
        %p395 = pneg %p197
        %p396 = pneg %p194
        %p397 = pneg %p218
        %p398 = pneg %p215
        %p399 = pneg %p239
        %p400 = pneg %p236
        %p401 = pneg %p260
        %p402 = pneg %p257
        %p403 = pneg %p286
        %p404 = pneg %p283
        %s405 = sand.u32 %s273, 1
        %s406 = scalar_lea.sflag [#allocation5], %s405
        %s407 = sand.u32 %s273, 1
        %s408 = scalar_lea.vmem [#allocation8], %s407
        %p409 = scmp.lt.s32.totalorder %s29, 1
        %s410 = scalar_select %p409, %s29, 1
        %s411 = smul.addr %s410, 8
        %s412 = scalar_lea.vmem %s0, %s411
        %v413 = vld [vmem:[%s412] sm:$0xff]
        %v414 = vlaneseq
        %v415 = vshrl.u32 %v414, 7
        %v416 = vsub.s32 0, %v415
        %v417 = vrot.slane %v413, %v416
        %419 = vbcast.lane.b32.xlu0 %v417, 256
        %v420 = vpop.permute.xlu0 %419
        %v421 = vlaneseq
        %v422 = vshrl.u32 %v421, 7
        %v423 = vsub.s32 1, %v422
        %v424 = vrot.slane %v413, %v423
        %426 = vbcast.lane.b32.xlu0 %v424, 256
        %v427 = vpop.permute.xlu0 %426
        %v428 = vlaneseq
        %v429 = vshrl.u32 %v428, 7
        %v430 = vsub.s32 2, %v429
        %v431 = vrot.slane %v413, %v430
        %433 = vbcast.lane.b32.xlu0 %v431, 256
        %v434 = vpop.permute.xlu0 %433
        %v435 = vlaneseq
        %v436 = vshrl.u32 %v435, 7
        %v437 = vsub.s32 3, %v436
        %v438 = vrot.slane %v413, %v437
        %440 = vbcast.lane.b32.xlu0 %v438, 256
        %v441 = vpop.permute.xlu0 %440
        %v442 = vlaneseq
        %v443 = vshrl.u32 %v442, 7
        %v444 = vsub.s32 4, %v443
        %v445 = vrot.slane %v413, %v444
        %447 = vbcast.lane.b32.xlu0 %v445, 256
        %v448 = vpop.permute.xlu0 %447
        %v449 = vlaneseq
        %v450 = vshrl.u32 %v449, 7
        %v451 = vsub.s32 5, %v450
        %v452 = vrot.slane %v413, %v451
        %454 = vbcast.lane.b32.xlu0 %v452, 256
        %v455 = vpop.permute.xlu0 %454
        %v456 = vlaneseq
        %v457 = vshrl.u32 %v456, 7
        %v458 = vsub.s32 6, %v457
        %v459 = vrot.slane %v413, %v458
        %461 = vbcast.lane.b32.xlu0 %v459, 256
        %v462 = vpop.permute.xlu0 %461
        %v463 = vlaneseq
        %v464 = vshrl.u32 %v463, 7
        %v465 = vsub.s32 7, %v464
        %v466 = vrot.slane %v413, %v465
        %468 = vbcast.lane.b32.xlu0 %v466, 256
        %v469 = vpop.permute.xlu0 %468
        %v470 = vld [vmem:[%s1] sm:$0x1]
        %v472 = vlaneseq
        %v473 = vshrl.u32 %v472, 7
        %v474 = vsub.s32 0, %v473
        %v475 = vrot.slane %v470, %v474
        %v477 = vmul.f32 %v420, %v475
        %v478 = vmul.f32 %v427, %v475
        %v479 = vmul.f32 %v434, %v475
        %v480 = vmul.f32 %v441, %v475
        %v481 = vmul.f32 %v448, %v475
        %v482 = vmul.f32 %v455, %v475
        %v483 = vmul.f32 %v462, %v475
        %v484 = vmul.f32 %v469, %v475
        %v485 = vld [vmem:[%s2] sm:$0x1]
        %v487 = vlaneseq
        %v488 = vshrl.u32 %v487, 7
        %v489 = vsub.s32 0, %v488
        %v490 = vrot.slane %v485, %v489
        %v492 = vadd.f32 %v477, %v490
        %v493 = vadd.f32 %v478, %v490
        %v494 = vadd.f32 %v479, %v490
        %v495 = vadd.f32 %v480, %v490
        %v496 = vadd.f32 %v481, %v490
        %v497 = vadd.f32 %v482, %v490
        %v498 = vadd.f32 %v483, %v490
        %v499 = vadd.f32 %v484, %v490
        %v500 = vmax.f32 %v492, 0.0
        %v501 = vmax.f32 %v493, 0.0
        %v502 = vmax.f32 %v494, 0.0
        %v503 = vmax.f32 %v495, 0.0
        %v504 = vmax.f32 %v496, 0.0
        %v505 = vmax.f32 %v497, 0.0
        %v506 = vmax.f32 %v498, 0.0
        %v507 = vmax.f32 %v499, 0.0
        %v508 = vld [vmem:[%s3] sm:$0xff]
        %v509 = vld [vmem:[%s3 + $0x8] sm:$0xff]
        %v510 = vld [vmem:[%s3 + $0x10] sm:$0xff]
        %v511 = vld [vmem:[%s3 + $0x18] sm:$0xff]
        %v512 = vld [vmem:[%s4] sm:$0x1]
        %v514 = vlaneseq
        %v515 = vshrl.u32 %v514, 7
        %v516 = vsub.s32 0, %v515
        %v517 = vrot.slane %v512, %v516
        %v527 = vcombine.low %v500, %v501
        %v528 = vcombine.low %v502, %v503
        %v529 = vcombine.low %v504, %v505
        %v530 = vcombine.low %v506, %v507
        %vm531 = vcmask 261120
        %v532 = vsel %vm531, %v527, 0
        %v534 = vsel %vm531, %v528, 0
        %v536 = vsel %vm531, %v529, 0
        %v538 = vsel %vm531, %v530, 0
        %540 = vmatprep.subr.mxu0 0.0
        %541 = vmatpush1.msra.mxu0 %v508
        %542 = vmatprep.subr.mxu0 0.0
        %543 = vmatpush1.msra.mxu0 %v509
        %544 = vmatprep.subr.mxu0 0.0
        %545 = vmatpush1.msra.mxu0 %v510
        %546 = vmatprep.subr.mxu0 0.0
        %547 = vmatpush1.msra.mxu0 %v511
        %548 = vmatprep.subr.mxu0 0.0
        %549 = vmatpush1.msra.mxu0 0.0
        %550 = vmatprep.subr.mxu0 0.0
        %551 = vmatpush1.msra.mxu0 0.0
        %552 = vmatprep.subr.mxu0 0.0
        %553 = vmatpush1.msra.mxu0 0.0
        %554 = vmatprep.subr.mxu0 0.0
        %555 = vmatpush1.msra.mxu0 0.0
        %556 = vmatprep.subr.mxu0 0.0
        %557 = vmatpush1.msra.mxu0 0.0
        %558 = vmatprep.subr.mxu0 0.0
        %559 = vmatpush1.msra.mxu0 0.0
        %560 = vmatprep.subr.mxu0 0.0
        %561 = vmatpush1.msra.mxu0 0.0
        %562 = vmatprep.subr.mxu0 0.0
        %563 = vmatpush1.msra.mxu0 0.0
        %564 = vmatprep.subr.mxu0 0.0
        %565 = vmatpush1.msra.mxu0 0.0
        %566 = vmatprep.subr.mxu0 0.0
        %567 = vmatpush1.msra.mxu0 0.0
        %568 = vmatprep.subr.mxu0 0.0
        %569 = vmatpush1.msra.mxu0 0.0
        %570 = vmatprep.subr.mxu0 0.0
        %571 = vmatpush1.msra.mxu0 0.0
        %572 = vmatprep.subr.mxu0 0.0
        %573 = vmatpush1.msra.mxu0 0.0
        %574 = vmatprep.subr.mxu0 0.0
        %575 = vmatpush1.msra.mxu0 0.0
        %576 = vmatprep.subr.mxu0 0.0
        %577 = vmatpush1.msra.mxu0 0.0
        %578 = vmatprep.subr.mxu0 0.0
        %579 = vmatpush1.msra.mxu0 0.0
        %580 = vmatprep.subr.mxu0 0.0
        %581 = vmatpush1.msra.mxu0 0.0
        %582 = vmatprep.subr.mxu0 0.0
        %583 = vmatpush1.msra.mxu0 0.0
        %584 = vmatprep.subr.mxu0 0.0
        %585 = vmatpush1.msra.mxu0 0.0
        %586 = vmatprep.subr.mxu0 0.0
        %587 = vmatpush1.msra.mxu0 0.0
        %588 = vmatprep.subr.mxu0 0.0
        %589 = vmatpush1.msra.mxu0 0.0
        %590 = vmatprep.subr.mxu0 0.0
        %591 = vmatpush1.msra.mxu0 0.0
        %592 = vmatprep.subr.mxu0 0.0
        %593 = vmatpush1.msra.mxu0 0.0
        %594 = vmatprep.subr.mxu0 0.0
        %595 = vmatpush1.msra.mxu0 0.0
        %596 = vmatprep.subr.mxu0 0.0
        %597 = vmatpush1.msra.mxu0 0.0
        %598 = vmatprep.subr.mxu0 0.0
        %599 = vmatpush1.msra.mxu0 0.0
        %600 = vmatprep.subr.mxu0 0.0
        %601 = vmatpush1.msra.mxu0 0.0
        %602 = vmatprep.subr.mxu0 0.0
        %603 = vmatpush1.msra.mxu0 0.0
        %604 = vmatprep.mubr.f32.mxu0 0.0
        %605 = vmatmul.mubr.f32.gmra.mrb[0].mxu0 %v532
        %v606 = vpop.f32.mrb[0].mxu0
        %v607 = vadd.f32 %v517, %v606
        %v608 = vpop.f32.mrb[0].mxu0
        %609 = vmatprep.mubr.f32.mxu0 0.0
        %610 = vmatmul.mubr.f32.gmra.mrb[0].mxu0 %v534
        %v611 = vpop.f32.mrb[0].mxu0
        %v612 = vadd.f32 %v517, %v611
        %v613 = vpop.f32.mrb[0].mxu0
        %614 = vmatprep.mubr.f32.mxu0 0.0
        %615 = vmatmul.mubr.f32.gmra.mrb[0].mxu0 %v536
        %v616 = vpop.f32.mrb[0].mxu0
        %v617 = vadd.f32 %v517, %v616
        %v618 = vpop.f32.mrb[0].mxu0
        %619 = vmatprep.mubr.f32.mxu0 0.0
        %620 = vmatmul.mubr.f32.gmra.mrb[0].mxu0 %v538
        %v621 = vpop.f32.mrb[0].mxu0
        %v622 = vadd.f32 %v517, %v621
        %v623 = vpop.f32.mrb[0].mxu0
        %624 = vdwg.mxu0
        %v625 = vld [vmem:[#allocation3] sm:$0xff]
        %v626 = vld [vmem:[#allocation3 + $0x8] sm:$0xff]
        %v627 = vld [vmem:[#allocation3 + $0x10] sm:$0xff]
        %v628 = vld [vmem:[#allocation3 + $0x18] sm:$0xff]
        %v629 = vld [vmem:[%s6] sm:$0x1]
        %v631 = vlaneseq
        %v632 = vshrl.u32 %v631, 7
        %v633 = vsub.s32 0, %v632
        %v634 = vrot.slane %v629, %v633
        %636 = vmatprep.subr.mxu0 0.0
        %637 = vmatpush1.msra.mxu0 %v625
        %638 = vmatprep.subr.mxu0 0.0
        %639 = vmatpush1.msra.mxu0 %v626
        %640 = vmatprep.subr.mxu0 0.0
        %641 = vmatpush1.msra.mxu0 %v627
        %642 = vmatprep.subr.mxu0 0.0
        %643 = vmatpush1.msra.mxu0 %v628
        %644 = vmatprep.subr.mxu0 0.0
        %645 = vmatpush1.msra.mxu0 0.0
        %646 = vmatprep.subr.mxu0 0.0
        %647 = vmatpush1.msra.mxu0 0.0
        %648 = vmatprep.subr.mxu0 0.0
        %649 = vmatpush1.msra.mxu0 0.0
        %650 = vmatprep.subr.mxu0 0.0
        %651 = vmatpush1.msra.mxu0 0.0
        %652 = vmatprep.subr.mxu0 0.0
        %653 = vmatpush1.msra.mxu0 0.0
        %654 = vmatprep.subr.mxu0 0.0
        %655 = vmatpush1.msra.mxu0 0.0
        %656 = vmatprep.subr.mxu0 0.0
        %657 = vmatpush1.msra.mxu0 0.0
        %658 = vmatprep.subr.mxu0 0.0
        %659 = vmatpush1.msra.mxu0 0.0
        %660 = vmatprep.subr.mxu0 0.0
        %661 = vmatpush1.msra.mxu0 0.0
        %662 = vmatprep.subr.mxu0 0.0
        %663 = vmatpush1.msra.mxu0 0.0
        %664 = vmatprep.subr.mxu0 0.0
        %665 = vmatpush1.msra.mxu0 0.0
        %666 = vmatprep.subr.mxu0 0.0
        %667 = vmatpush1.msra.mxu0 0.0
        %668 = vmatprep.subr.mxu0 0.0
        %669 = vmatpush1.msra.mxu0 0.0
        %670 = vmatprep.subr.mxu0 0.0
        %671 = vmatpush1.msra.mxu0 0.0
        %672 = vmatprep.subr.mxu0 0.0
        %673 = vmatpush1.msra.mxu0 0.0
        %674 = vmatprep.subr.mxu0 0.0
        %675 = vmatpush1.msra.mxu0 0.0
        %676 = vmatprep.subr.mxu0 0.0
        %677 = vmatpush1.msra.mxu0 0.0
        %678 = vmatprep.subr.mxu0 0.0
        %679 = vmatpush1.msra.mxu0 0.0
        %680 = vmatprep.subr.mxu0 0.0
        %681 = vmatpush1.msra.mxu0 0.0
        %682 = vmatprep.subr.mxu0 0.0
        %683 = vmatpush1.msra.mxu0 0.0
        %684 = vmatprep.subr.mxu0 0.0
        %685 = vmatpush1.msra.mxu0 0.0
        %686 = vmatprep.subr.mxu0 0.0
        %687 = vmatpush1.msra.mxu0 0.0
        %688 = vmatprep.subr.mxu0 0.0
        %689 = vmatpush1.msra.mxu0 0.0
        %690 = vmatprep.subr.mxu0 0.0
        %691 = vmatpush1.msra.mxu0 0.0
        %692 = vmatprep.subr.mxu0 0.0
        %693 = vmatpush1.msra.mxu0 0.0
        %694 = vmatprep.subr.mxu0 0.0
        %695 = vmatpush1.msra.mxu0 0.0
        %696 = vmatprep.subr.mxu0 0.0
        %697 = vmatpush1.msra.mxu0 0.0
        %698 = vmatprep.subr.mxu0 0.0
        %699 = vmatpush1.msra.mxu0 0.0
        %700 = vmatprep.mubr.f32.mxu0 0.0
        %701 = vmatmul.mubr.f32.gmra.mrb[0].mxu0 %v532
        %v702 = vpop.f32.mrb[0].mxu0
        %v703 = vadd.f32 %v634, %v702
        %v704 = vpop.f32.mrb[0].mxu0
        %705 = vmatprep.mubr.f32.mxu0 0.0
        %706 = vmatmul.mubr.f32.gmra.mrb[0].mxu0 %v534
        %v707 = vpop.f32.mrb[0].mxu0
        %v708 = vadd.f32 %v634, %v707
        %v709 = vpop.f32.mrb[0].mxu0
        %710 = vmatprep.mubr.f32.mxu0 0.0
        %711 = vmatmul.mubr.f32.gmra.mrb[0].mxu0 %v536
        %v712 = vpop.f32.mrb[0].mxu0
        %v713 = vadd.f32 %v634, %v712
        %v714 = vpop.f32.mrb[0].mxu0
        %715 = vmatprep.mubr.f32.mxu0 0.0
        %716 = vmatmul.mubr.f32.gmra.mrb[0].mxu0 %v538
        %v717 = vpop.f32.mrb[0].mxu0
        %v718 = vadd.f32 %v634, %v717
        %v719 = vpop.f32.mrb[0].mxu0
        %720 = vdwg.mxu0
        %v725 = vcombine.high %v607, %v607
        %v727 = vunpack.c.l.s4 1966171168
        %v728 = vunpack.c.0.s8 %v727
        %v729 = vlaneseq
        %v730 = vshrl.u32 %v729, 7
        %v731 = vsub.s32 %v728, %v730
        %v732 = vrot.slane %v607, %v731
        %v734 = vunpack.c.l.s4 1966171168
        %v735 = vunpack.c.0.s8 %v734
        %v736 = vlaneseq
        %v737 = vshrl.u32 %v736, 7
        %v738 = vsub.s32 %v735, %v737
        %v739 = vrot.slane %v725, %v738
        %v740 = vcombine.high %v732, %v732
        %v741 = vcombine.high %v739, %v739
        %v743 = vunpack.c.l.s4 1966171168
        %v744 = vunpack.c.0.s8 %v743
        %v745 = vlaneseq
        %v746 = vshrl.u32 %v745, 7
        %v747 = vsub.s32 %v744, %v746
        %v748 = vrot.slane %v732, %v747
        %v750 = vunpack.c.l.s4 1966171168
        %v751 = vunpack.c.0.s8 %v750
        %v752 = vlaneseq
        %v753 = vshrl.u32 %v752, 7
        %v754 = vsub.s32 %v751, %v753
        %v755 = vrot.slane %v739, %v754
        %v757 = vunpack.c.l.s4 1966171168
        %v758 = vunpack.c.0.s8 %v757
        %v759 = vlaneseq
        %v760 = vshrl.u32 %v759, 7
        %v761 = vsub.s32 %v758, %v760
        %v762 = vrot.slane %v740, %v761
        %v764 = vunpack.c.l.s4 1966171168
        %v765 = vunpack.c.0.s8 %v764
        %v766 = vlaneseq
        %v767 = vshrl.u32 %v766, 7
        %v768 = vsub.s32 %v765, %v767
        %v769 = vrot.slane %v741, %v768
        %v770 = vcombine.high %v748, %v748
        %v771 = vcombine.high %v755, %v755
        %v772 = vcombine.high %v762, %v762
        %v773 = vcombine.high %v769, %v769
        %v774 = vcombine.high %v612, %v612
        %v776 = vunpack.c.l.s4 1966171168
        %v777 = vunpack.c.0.s8 %v776
        %v778 = vlaneseq
        %v779 = vshrl.u32 %v778, 7
        %v780 = vsub.s32 %v777, %v779
        %v781 = vrot.slane %v612, %v780
        %v783 = vunpack.c.l.s4 1966171168
        %v784 = vunpack.c.0.s8 %v783
        %v785 = vlaneseq
        %v786 = vshrl.u32 %v785, 7
        %v787 = vsub.s32 %v784, %v786
        %v788 = vrot.slane %v774, %v787
        %v789 = vcombine.high %v781, %v781
        %v790 = vcombine.high %v788, %v788
        %v792 = vunpack.c.l.s4 1966171168
        %v793 = vunpack.c.0.s8 %v792
        %v794 = vlaneseq
        %v795 = vshrl.u32 %v794, 7
        %v796 = vsub.s32 %v793, %v795
        %v797 = vrot.slane %v781, %v796
        %v799 = vunpack.c.l.s4 1966171168
        %v800 = vunpack.c.0.s8 %v799
        %v801 = vlaneseq
        %v802 = vshrl.u32 %v801, 7
        %v803 = vsub.s32 %v800, %v802
        %v804 = vrot.slane %v788, %v803
        %v806 = vunpack.c.l.s4 1966171168
        %v807 = vunpack.c.0.s8 %v806
        %v808 = vlaneseq
        %v809 = vshrl.u32 %v808, 7
        %v810 = vsub.s32 %v807, %v809
        %v811 = vrot.slane %v789, %v810
        %v813 = vunpack.c.l.s4 1966171168
        %v814 = vunpack.c.0.s8 %v813
        %v815 = vlaneseq
        %v816 = vshrl.u32 %v815, 7
        %v817 = vsub.s32 %v814, %v816
        %v818 = vrot.slane %v790, %v817
        %v819 = vcombine.high %v797, %v797
        %v820 = vcombine.high %v804, %v804
        %v821 = vcombine.high %v811, %v811
        %v822 = vcombine.high %v818, %v818
        %v823 = vcombine.high %v617, %v617
        %v825 = vunpack.c.l.s4 1966171168
        %v826 = vunpack.c.0.s8 %v825
        %v827 = vlaneseq
        %v828 = vshrl.u32 %v827, 7
        %v829 = vsub.s32 %v826, %v828
        %v830 = vrot.slane %v617, %v829
        %v832 = vunpack.c.l.s4 1966171168
        %v833 = vunpack.c.0.s8 %v832
        %v834 = vlaneseq
        %v835 = vshrl.u32 %v834, 7
        %v836 = vsub.s32 %v833, %v835
        %v837 = vrot.slane %v823, %v836
        %v838 = vcombine.high %v830, %v830
        %v839 = vcombine.high %v837, %v837
        %v841 = vunpack.c.l.s4 1966171168
        %v842 = vunpack.c.0.s8 %v841
        %v843 = vlaneseq
        %v844 = vshrl.u32 %v843, 7
        %v845 = vsub.s32 %v842, %v844
        %v846 = vrot.slane %v830, %v845
        %v848 = vunpack.c.l.s4 1966171168
        %v849 = vunpack.c.0.s8 %v848
        %v850 = vlaneseq
        %v851 = vshrl.u32 %v850, 7
        %v852 = vsub.s32 %v849, %v851
        %v853 = vrot.slane %v837, %v852
        %v855 = vunpack.c.l.s4 1966171168
        %v856 = vunpack.c.0.s8 %v855
        %v857 = vlaneseq
        %v858 = vshrl.u32 %v857, 7
        %v859 = vsub.s32 %v856, %v858
        %v860 = vrot.slane %v838, %v859
        %v862 = vunpack.c.l.s4 1966171168
        %v863 = vunpack.c.0.s8 %v862
        %v864 = vlaneseq
        %v865 = vshrl.u32 %v864, 7
        %v866 = vsub.s32 %v863, %v865
        %v867 = vrot.slane %v839, %v866
        %v868 = vcombine.high %v846, %v846
        %v869 = vcombine.high %v853, %v853
        %v870 = vcombine.high %v860, %v860
        %v871 = vcombine.high %v867, %v867
        %v872 = vcombine.high %v622, %v622
        %v874 = vunpack.c.l.s4 1966171168
        %v875 = vunpack.c.0.s8 %v874
        %v876 = vlaneseq
        %v877 = vshrl.u32 %v876, 7
        %v878 = vsub.s32 %v875, %v877
        %v879 = vrot.slane %v622, %v878
        %v881 = vunpack.c.l.s4 1966171168
        %v882 = vunpack.c.0.s8 %v881
        %v883 = vlaneseq
        %v884 = vshrl.u32 %v883, 7
        %v885 = vsub.s32 %v882, %v884
        %v886 = vrot.slane %v872, %v885
        %v887 = vcombine.high %v879, %v879
        %v888 = vcombine.high %v886, %v886
        %v890 = vunpack.c.l.s4 1966171168
        %v891 = vunpack.c.0.s8 %v890
        %v892 = vlaneseq
        %v893 = vshrl.u32 %v892, 7
        %v894 = vsub.s32 %v891, %v893
        %v895 = vrot.slane %v879, %v894
        %v897 = vunpack.c.l.s4 1966171168
        %v898 = vunpack.c.0.s8 %v897
        %v899 = vlaneseq
        %v900 = vshrl.u32 %v899, 7
        %v901 = vsub.s32 %v898, %v900
        %v902 = vrot.slane %v886, %v901
        %v904 = vunpack.c.l.s4 1966171168
        %v905 = vunpack.c.0.s8 %v904
        %v906 = vlaneseq
        %v907 = vshrl.u32 %v906, 7
        %v908 = vsub.s32 %v905, %v907
        %v909 = vrot.slane %v887, %v908
        %v911 = vunpack.c.l.s4 1966171168
        %v912 = vunpack.c.0.s8 %v911
        %v913 = vlaneseq
        %v914 = vshrl.u32 %v913, 7
        %v915 = vsub.s32 %v912, %v914
        %v916 = vrot.slane %v888, %v915
        %v917 = vcombine.high %v895, %v895
        %v918 = vcombine.high %v902, %v902
        %v919 = vcombine.high %v909, %v909
        %v920 = vcombine.high %v916, %v916
        %v925 = vcombine.high %v703, %v703
        %v926 = vcombine.high %v708, %v708
        %v927 = vcombine.high %v713, %v713
        %v928 = vcombine.high %v718, %v718
        %v933 = vlaneseq
        %v934 = vshrl.u32 %v933, 7
        %v935 = vsub.s32 0, %v934
        %v936 = vrot.slane %v748, %v935
        %v937 = vlaneseq
        %v938 = vshrl.u32 %v937, 7
        %v939 = vsub.s32 0, %v938
        %v940 = vrot.slane %v762, %v939
        %v941 = vlaneseq
        %v942 = vshrl.u32 %v941, 7
        %v943 = vsub.s32 0, %v942
        %v944 = vrot.slane %v770, %v943
        %v945 = vlaneseq
        %v946 = vshrl.u32 %v945, 7
        %v947 = vsub.s32 0, %v946
        %v948 = vrot.slane %v772, %v947
        %v949 = vlaneseq
        %v950 = vshrl.u32 %v949, 7
        %v951 = vsub.s32 0, %v950
        %v952 = vrot.slane %v755, %v951
        %v953 = vlaneseq
        %v954 = vshrl.u32 %v953, 7
        %v955 = vsub.s32 0, %v954
        %v956 = vrot.slane %v769, %v955
        %v957 = vlaneseq
        %v958 = vshrl.u32 %v957, 7
        %v959 = vsub.s32 0, %v958
        %v960 = vrot.slane %v771, %v959
        %v961 = vlaneseq
        %v962 = vshrl.u32 %v961, 7
        %v963 = vsub.s32 0, %v962
        %v964 = vrot.slane %v773, %v963
        %v965 = vlaneseq
        %v966 = vshrl.u32 %v965, 7
        %v967 = vsub.s32 0, %v966
        %v968 = vrot.slane %v797, %v967
        %v969 = vlaneseq
        %v970 = vshrl.u32 %v969, 7
        %v971 = vsub.s32 0, %v970
        %v972 = vrot.slane %v811, %v971
        %v973 = vlaneseq
        %v974 = vshrl.u32 %v973, 7
        %v975 = vsub.s32 0, %v974
        %v976 = vrot.slane %v819, %v975
        %v977 = vlaneseq
        %v978 = vshrl.u32 %v977, 7
        %v979 = vsub.s32 0, %v978
        %v980 = vrot.slane %v821, %v979
        %v981 = vlaneseq
        %v982 = vshrl.u32 %v981, 7
        %v983 = vsub.s32 0, %v982
        %v984 = vrot.slane %v804, %v983
        %v985 = vlaneseq
        %v986 = vshrl.u32 %v985, 7
        %v987 = vsub.s32 0, %v986
        %v988 = vrot.slane %v818, %v987
        %v989 = vlaneseq
        %v990 = vshrl.u32 %v989, 7
        %v991 = vsub.s32 0, %v990
        %v992 = vrot.slane %v820, %v991
        %v993 = vlaneseq
        %v994 = vshrl.u32 %v993, 7
        %v995 = vsub.s32 0, %v994
        %v996 = vrot.slane %v822, %v995
        %v997 = vlaneseq
        %v998 = vshrl.u32 %v997, 7
        %v999 = vsub.s32 0, %v998
        %v1000 = vrot.slane %v846, %v999
        %v1001 = vlaneseq
        %v1002 = vshrl.u32 %v1001, 7
        %v1003 = vsub.s32 0, %v1002
        %v1004 = vrot.slane %v860, %v1003
        %v1005 = vlaneseq
        %v1006 = vshrl.u32 %v1005, 7
        %v1007 = vsub.s32 0, %v1006
        %v1008 = vrot.slane %v868, %v1007
        %v1009 = vlaneseq
        %v1010 = vshrl.u32 %v1009, 7
        %v1011 = vsub.s32 0, %v1010
        %v1012 = vrot.slane %v870, %v1011
        %v1013 = vlaneseq
        %v1014 = vshrl.u32 %v1013, 7
        %v1015 = vsub.s32 0, %v1014
        %v1016 = vrot.slane %v853, %v1015
        %v1017 = vlaneseq
        %v1018 = vshrl.u32 %v1017, 7
        %v1019 = vsub.s32 0, %v1018
        %v1020 = vrot.slane %v867, %v1019
        %v1021 = vlaneseq
        %v1022 = vshrl.u32 %v1021, 7
        %v1023 = vsub.s32 0, %v1022
        %v1024 = vrot.slane %v869, %v1023
        %v1025 = vlaneseq
        %v1026 = vshrl.u32 %v1025, 7
        %v1027 = vsub.s32 0, %v1026
        %v1028 = vrot.slane %v871, %v1027
        %v1029 = vlaneseq
        %v1030 = vshrl.u32 %v1029, 7
        %v1031 = vsub.s32 0, %v1030
        %v1032 = vrot.slane %v895, %v1031
        %v1033 = vlaneseq
        %v1034 = vshrl.u32 %v1033, 7
        %v1035 = vsub.s32 0, %v1034
        %v1036 = vrot.slane %v909, %v1035
        %v1037 = vlaneseq
        %v1038 = vshrl.u32 %v1037, 7
        %v1039 = vsub.s32 0, %v1038
        %v1040 = vrot.slane %v917, %v1039
        %v1041 = vlaneseq
        %v1042 = vshrl.u32 %v1041, 7
        %v1043 = vsub.s32 0, %v1042
        %v1044 = vrot.slane %v919, %v1043
        %v1045 = vlaneseq
        %v1046 = vshrl.u32 %v1045, 7
        %v1047 = vsub.s32 0, %v1046
        %v1048 = vrot.slane %v902, %v1047
        %v1049 = vlaneseq
        %v1050 = vshrl.u32 %v1049, 7
        %v1051 = vsub.s32 0, %v1050
        %v1052 = vrot.slane %v916, %v1051
        %v1053 = vlaneseq
        %v1054 = vshrl.u32 %v1053, 7
        %v1055 = vsub.s32 0, %v1054
        %v1056 = vrot.slane %v918, %v1055
        %v1057 = vlaneseq
        %v1058 = vshrl.u32 %v1057, 7
        %v1059 = vsub.s32 0, %v1058
        %v1060 = vrot.slane %v920, %v1059
        %v1093 = vmul.f32 %v936, %v703
        %v1094 = vmul.f32 %v940, %v703
        %v1095 = vmul.f32 %v944, %v703
        %v1096 = vmul.f32 %v948, %v703
        %v1097 = vmul.f32 %v952, %v925
        %v1098 = vmul.f32 %v956, %v925
        %v1099 = vmul.f32 %v960, %v925
        %v1100 = vmul.f32 %v964, %v925
        %v1101 = vmul.f32 %v968, %v708
        %v1102 = vmul.f32 %v972, %v708
        %v1103 = vmul.f32 %v976, %v708
        %v1104 = vmul.f32 %v980, %v708
        %v1105 = vmul.f32 %v984, %v926
        %v1106 = vmul.f32 %v988, %v926
        %v1107 = vmul.f32 %v992, %v926
        %v1108 = vmul.f32 %v996, %v926
        %v1109 = vmul.f32 %v1000, %v713
        %v1110 = vmul.f32 %v1004, %v713
        %v1111 = vmul.f32 %v1008, %v713
        %v1112 = vmul.f32 %v1012, %v713
        %v1113 = vmul.f32 %v1016, %v927
        %v1114 = vmul.f32 %v1020, %v927
        %v1115 = vmul.f32 %v1024, %v927
        %v1116 = vmul.f32 %v1028, %v927
        %v1117 = vmul.f32 %v1032, %v718
        %v1118 = vmul.f32 %v1036, %v718
        %v1119 = vmul.f32 %v1040, %v718
        %v1120 = vmul.f32 %v1044, %v718
        %v1121 = vmul.f32 %v1048, %v928
        %v1122 = vmul.f32 %v1052, %v928
        %v1123 = vmul.f32 %v1056, %v928
        %v1124 = vmul.f32 %v1060, %v928
        %vm1125 = vcmask 257024
        %v1126 = vsel %vm1125, %v1093, 0.0
        %v1127 = vsel %vm1125, %v1097, 0.0
        %v1128 = vadd.f32 %v1126, %v1127
        %v1129 = vsel %vm1125, %v1101, 0.0
        %v1130 = vadd.f32 %v1128, %v1129
        %v1131 = vsel %vm1125, %v1105, 0.0
        %v1132 = vadd.f32 %v1130, %v1131
        %v1133 = vsel %vm1125, %v1109, 0.0
        %v1134 = vadd.f32 %v1132, %v1133
        %v1135 = vsel %vm1125, %v1113, 0.0
        %v1136 = vadd.f32 %v1134, %v1135
        %v1137 = vsel %vm1125, %v1117, 0.0
        %v1138 = vadd.f32 %v1136, %v1137
        %v1139 = vsel %vm1125, %v1121, 0.0
        %v1140 = vadd.f32 %v1138, %v1139
        %v1141 = vsel %vm1125, %v1094, 0.0
        %v1142 = vsel %vm1125, %v1098, 0.0
        %v1143 = vadd.f32 %v1141, %v1142
        %v1144 = vsel %vm1125, %v1102, 0.0
        %v1145 = vadd.f32 %v1143, %v1144
        %v1146 = vsel %vm1125, %v1106, 0.0
        %v1147 = vadd.f32 %v1145, %v1146
        %v1148 = vsel %vm1125, %v1110, 0.0
        %v1149 = vadd.f32 %v1147, %v1148
        %v1150 = vsel %vm1125, %v1114, 0.0
        %v1151 = vadd.f32 %v1149, %v1150
        %v1152 = vsel %vm1125, %v1118, 0.0
        %v1153 = vadd.f32 %v1151, %v1152
        %v1154 = vsel %vm1125, %v1122, 0.0
        %v1155 = vadd.f32 %v1153, %v1154
        %v1156 = vsel %vm1125, %v1095, 0.0
        %v1157 = vsel %vm1125, %v1099, 0.0
        %v1158 = vadd.f32 %v1156, %v1157
        %v1159 = vsel %vm1125, %v1103, 0.0
        %v1160 = vadd.f32 %v1158, %v1159
        %v1161 = vsel %vm1125, %v1107, 0.0
        %v1162 = vadd.f32 %v1160, %v1161
        %v1163 = vsel %vm1125, %v1111, 0.0
        %v1164 = vadd.f32 %v1162, %v1163
        %v1165 = vsel %vm1125, %v1115, 0.0
        %v1166 = vadd.f32 %v1164, %v1165
        %v1167 = vsel %vm1125, %v1119, 0.0
        %v1168 = vadd.f32 %v1166, %v1167
        %v1169 = vsel %vm1125, %v1123, 0.0
        %v1170 = vadd.f32 %v1168, %v1169
        %v1171 = vsel %vm1125, %v1096, 0.0
        %v1172 = vsel %vm1125, %v1100, 0.0
        %v1173 = vadd.f32 %v1171, %v1172
        %v1174 = vsel %vm1125, %v1104, 0.0
        %v1175 = vadd.f32 %v1173, %v1174
        %v1176 = vsel %vm1125, %v1108, 0.0
        %v1177 = vadd.f32 %v1175, %v1176
        %v1178 = vsel %vm1125, %v1112, 0.0
        %v1179 = vadd.f32 %v1177, %v1178
        %v1180 = vsel %vm1125, %v1116, 0.0
        %v1181 = vadd.f32 %v1179, %v1180
        %v1182 = vsel %vm1125, %v1120, 0.0
        %v1183 = vadd.f32 %v1181, %v1182
        %v1184 = vsel %vm1125, %v1124, 0.0
        %v1185 = vadd.f32 %v1183, %v1184
        %v1186 = vmul.f32 %v1140, 0.35355338
        %v1187 = vmul.f32 %v1155, 0.35355338
        %v1188 = vmul.f32 %v1170, 0.35355338
        %v1189 = vmul.f32 %v1185, 0.35355338
        %v1190 = vld [vmem:[#allocation6] sm:$0xff]
        %v1191 = vld [vmem:[#allocation6 + $0x8] sm:$0xff]
        %v1192 = vld [vmem:[#allocation6 + $0x10] sm:$0xff]
        %v1193 = vld [vmem:[#allocation6 + $0x18] sm:$0xff]
        %v1194 = vld [vmem:[%s8] sm:$0x1]
        %v1196 = vlaneseq
        %v1197 = vshrl.u32 %v1196, 7
        %v1198 = vsub.s32 0, %v1197
        %v1199 = vrot.slane %v1194, %v1198
        %v1205 = vcombine.low %v1186, %v1187
        %v1206 = vcombine.low %v1188, %v1189
        %v1207 = vsel %vm531, %v1205, 0
        %v1209 = vsel %vm531, %v1206, 0
        %1211 = vmatprep.subr.mxu0 0.0
        %1212 = vmatpush1.msra.mxu0 %v1190
        %1213 = vmatprep.subr.mxu0 0.0
        %1214 = vmatpush1.msra.mxu0 %v1191
        %1215 = vmatprep.subr.mxu0 0.0
        %1216 = vmatpush1.msra.mxu0 %v1192
        %1217 = vmatprep.subr.mxu0 0.0
        %1218 = vmatpush1.msra.mxu0 %v1193
        %1219 = vmatprep.subr.mxu0 0.0
        %1220 = vmatpush1.msra.mxu0 0.0
        %1221 = vmatprep.subr.mxu0 0.0
        %1222 = vmatpush1.msra.mxu0 0.0
        %1223 = vmatprep.subr.mxu0 0.0
        %1224 = vmatpush1.msra.mxu0 0.0
        %1225 = vmatprep.subr.mxu0 0.0
        %1226 = vmatpush1.msra.mxu0 0.0
        %1227 = vmatprep.subr.mxu0 0.0
        %1228 = vmatpush1.msra.mxu0 0.0
        %1229 = vmatprep.subr.mxu0 0.0
        %1230 = vmatpush1.msra.mxu0 0.0
        %1231 = vmatprep.subr.mxu0 0.0
        %1232 = vmatpush1.msra.mxu0 0.0
        %1233 = vmatprep.subr.mxu0 0.0
        %1234 = vmatpush1.msra.mxu0 0.0
        %1235 = vmatprep.subr.mxu0 0.0
        %1236 = vmatpush1.msra.mxu0 0.0
        %1237 = vmatprep.subr.mxu0 0.0
        %1238 = vmatpush1.msra.mxu0 0.0
        %1239 = vmatprep.subr.mxu0 0.0
        %1240 = vmatpush1.msra.mxu0 0.0
        %1241 = vmatprep.subr.mxu0 0.0
        %1242 = vmatpush1.msra.mxu0 0.0
        %1243 = vmatprep.subr.mxu0 0.0
        %1244 = vmatpush1.msra.mxu0 0.0
        %1245 = vmatprep.subr.mxu0 0.0
        %1246 = vmatpush1.msra.mxu0 0.0
        %1247 = vmatprep.subr.mxu0 0.0
        %1248 = vmatpush1.msra.mxu0 0.0
        %1249 = vmatprep.subr.mxu0 0.0
        %1250 = vmatpush1.msra.mxu0 0.0
        %1251 = vmatprep.subr.mxu0 0.0
        %1252 = vmatpush1.msra.mxu0 0.0
        %1253 = vmatprep.subr.mxu0 0.0
        %1254 = vmatpush1.msra.mxu0 0.0
        %1255 = vmatprep.subr.mxu0 0.0
        %1256 = vmatpush1.msra.mxu0 0.0
        %1257 = vmatprep.subr.mxu0 0.0
        %1258 = vmatpush1.msra.mxu0 0.0
        %1259 = vmatprep.subr.mxu0 0.0
        %1260 = vmatpush1.msra.mxu0 0.0
        %1261 = vmatprep.subr.mxu0 0.0
        %1262 = vmatpush1.msra.mxu0 0.0
        %1263 = vmatprep.subr.mxu0 0.0
        %1264 = vmatpush1.msra.mxu0 0.0
        %1265 = vmatprep.subr.mxu0 0.0
        %1266 = vmatpush1.msra.mxu0 0.0
        %1267 = vmatprep.subr.mxu0 0.0
        %1268 = vmatpush1.msra.mxu0 0.0
        %1269 = vmatprep.subr.mxu0 0.0
        %1270 = vmatpush1.msra.mxu0 0.0
        %1271 = vmatprep.subr.mxu0 0.0
        %1272 = vmatpush1.msra.mxu0 0.0
        %1273 = vmatprep.subr.mxu0 0.0
        %1274 = vmatpush1.msra.mxu0 0.0
        %1275 = vmatprep.mubr.f32.mxu0 0.0
        %1276 = vmatmul.mubr.f32.gmra.mrb[0].mxu0 %v1207
        %v1277 = vpop.f32.mrb[0].mxu0
        %v1278 = vadd.f32 %v1199, %v1277
        %v1279 = vpop.f32.mrb[0].mxu0
        %1280 = vmatprep.mubr.f32.mxu0 0.0
        %1281 = vmatmul.mubr.f32.gmra.mrb[0].mxu0 %v1209
        %v1282 = vpop.f32.mrb[0].mxu0
        %v1283 = vadd.f32 %v1199, %v1282
        %v1284 = vpop.f32.mrb[0].mxu0
        %1285 = vdwg.mxu0
        %v1286 = vmax.f32 %v1278, 0.0
        %v1287 = vmax.f32 %v1283, 0.0
        %v1288 = vld [vmem:[%s9] sm:$0x1]
        %v1290 = vlaneseq
        %v1291 = vshrl.u32 %v1290, 7
        %v1292 = vsub.s32 0, %v1291
        %v1293 = vrot.slane %v1288, %v1292
        %v1295 = vmul.f32 %v1286, %v1293
        %v1296 = vmul.f32 %v1287, %v1293
        %v1297 = vsel %vm531, %v1295, 0.0
        %1298 = vadd.xlane.f32.xlu0 %v1297
        %v1299 = vpop.xlane.xlu0 %1298
        %v1300 = vsel %vm531, %v1296, 0.0
        %1301 = vadd.xlane.f32.xlu0 %v1300
        %v1302 = vpop.xlane.xlu0 %1301
        %v1303 = vld [vmem:[#allocation2] sm:$0x1]
        %v1305 = vlaneseq
        %v1306 = vshrl.u32 %v1305, 7
        %v1307 = vsub.s32 0, %v1306
        %v1308 = vrot.slane %v1303, %v1307
        %v1310 = vadd.f32 %v1299, %v1308
        %v1311 = vadd.f32 %v1302, %v1308
        %1312 = vxpose.xlu0.b32.start [1/16] %v1310, 128
        %1313 = vxpose.xlu0.b32.cont [2/16] %v1311, 128
        %1314 = vxpose.xlu0.b32.cont [3/16] 0.0, 128
        %1315 = vxpose.xlu0.b32.cont [4/16] 0.0, 128
        %1316 = vxpose.xlu0.b32.cont [5/16] 0.0, 128
        %1317 = vxpose.xlu0.b32.cont [6/16] 0.0, 128
        %1318 = vxpose.xlu0.b32.cont [7/16] 0.0, 128
        %1319 = vxpose.xlu0.b32.cont [8/16] 0.0, 128
        %1320 = vxpose.xlu0.b32.cont [9/16] 0.0, 128
        %1321 = vxpose.xlu0.b32.cont [10/16] 0.0, 128
        %1322 = vxpose.xlu0.b32.cont [11/16] 0.0, 128
        %1323 = vxpose.xlu0.b32.cont [12/16] 0.0, 128
        %1324 = vxpose.xlu0.b32.cont [13/16] 0.0, 128
        %1325 = vxpose.xlu0.b32.cont [14/16] 0.0, 128
        %1326 = vxpose.xlu0.b32.cont [15/16] 0.0, 128
        %1327 = vxpose.xlu0.b32.end [16/16] 0.0, 128
        %v1328 = vpop.trf.xlu0
        %v1329 = vpop.trf.xlu0
        %v1330 = vpop.trf.xlu0
        %v1331 = vpop.trf.xlu0
        %v1332 = vpop.trf.xlu0
        %v1333 = vpop.trf.xlu0
        %v1334 = vpop.trf.xlu0
        %v1335 = vpop.trf.xlu0
        %v1336 = vpop.trf.xlu0
        %v1337 = vpop.trf.xlu0
        %v1338 = vpop.trf.xlu0
        %v1339 = vpop.trf.xlu0
        %v1340 = vpop.trf.xlu0
        %v1341 = vpop.trf.xlu0
        %v1342 = vpop.trf.xlu0
        %v1343 = vpop.trf.xlu0
        %vm1344 = vcmask 122880
        %1345 = vst.msk [vmem:[%s408] sm:$0x1] %vm1344, %v1328
        %s1346 = sand.u32 %s273, 1
        %s1347 = scalar_lea.sflag [#allocation5], %s1346
        %s1348 = sand.u32 %s273, 1
        %s1349 = scalar_lea.vmem [#allocation8], %s1348
        // Predicated region
        $region73: #{tpu_custom_call.1} parent=63 // pred_check
          %p1350 = pneg %p283
        $region74: #{tpu_custom_call.1} parent=63 // pred_check_branch
          %1352 = sbr.rel (%p1350) target = $region76
        $region75: #{tpu_custom_call.1} parent=63 // pred_region
          %s1354 = ssub.s32 16, 16
          %1355 = vsyncadd %s1347, %s1354
          %s1356 = smul.addr %s29, 16
          %s1357 = scalar_lea.hbm %s11, %s1356
          %s1359 = sshll.u32 %s1349, 4
          %s1360 = int_to_ptr.vmem [resolvable:$true] %s1359
          %1362 = dma.vmem_to_hbm [thread:$0]  %s1360, 16, %s1357, %s1347
        $region76: #{tpu_custom_call.1} parent=63 // pred_fallthru
          _
      $region64: #{tpu_custom_call.1} parent=5 // pred_fallthru
        _
      %p1363 = scmp.le.s32.totalorder 2, %s24
      // Predicated region
      $region77: #{tpu_custom_call.1} parent=5 // pred_check
        %p1364 = pneg %p1363
      $region78: #{tpu_custom_call.1} parent=5 // pred_check_branch
        %1366 = sbr.rel (%p1364) target = $region80
      $region79: #{tpu_custom_call.1} parent=5 // pred_region
        %s1367 = ssub.s32 %s24, 2
        // Predicated region
        $region81: #{tpu_custom_call.1} parent=79 // pred_check
          %p1368 = pneg %p289
        $region82: #{tpu_custom_call.1} parent=79 // pred_check_branch
          %1370 = sbr.rel (%p1368) target = $region84
        $region83: #{tpu_custom_call.1} parent=79 // pred_region
          %s1371 = sand.u32 %s274, 1
          %s1372 = scalar_lea.sflag [#allocation5], %s1371
          %s1373 = sand.u32 %s274, 1
          %s1374 = scalar_lea.vmem [#allocation8], %s1373
          %1375 = dma.done %s1372, 16
        $region84: #{tpu_custom_call.1} parent=79 // pred_fallthru
          _
      $region80: #{tpu_custom_call.1} parent=5 // pred_fallthru
        _
    $region6: #{tpu_custom_call.1} parent=1 // loop_footer
      %s28 = sadd.s32 1, %s24
    $region7: #{tpu_custom_call.1} parent=1 // loop_footer_branch
      %23 = sbr.rel target = $region3
    $region8: #{tpu_custom_call.1} parent=1 // loop_exit
      _
    %1376 = vsyncpa [#allocation4], 1
    %s1377 = scalar_lea.sflag [#allocation4], 1
    %1378 = vsyncpa %s1377, 1
    %1379 = vsyncpa [#allocation7], 1
    %1380 = vsyncpa [#allocation5], 1
    %s1381 = scalar_lea.sflag [#allocation5], 1
    %1382 = vsyncpa %s1381, 1

</llo_original>
